<compile_context>
chip_gen: v6e
topology: v6e:2x2x1
jax: 0.10.0
libtpu: 0.0.40
codegen_flags: <defaults>
</compile_context>

<pallas_src>
import functools

import jax
import jax.numpy as jnp
from jax.experimental import pallas as pl
from jax.experimental.pallas import tpu as pltpu


# ---------------------------------------------------------------------------
# generation-aware knobs
# ---------------------------------------------------------------------------
def _device_kind() -> str:
    try:
        return jax.devices()[0].device_kind.lower()
    except Exception:
        return ""


def _act_dtype():
    """bf16 elementwise/GELU on v6e/v7x (bf16 VPU/EUP); f32 on v5e and older."""
    kind = _device_kind()
    return jnp.bfloat16 if ("v6" in kind or "v7" in kind) else jnp.float32


def _vmem_limit_bytes():
    """Explicit scoped-VMEM ceiling derived from physical VMEM (None = default)."""
    try:
        cap = int(pltpu.get_tpu_info().vmem_capacity_bytes)
        if cap >= (32 << 20):
            return min((cap * 3) // 4, 100 << 20)  # ~48 MiB on v7x, ~96 MiB on v5e/v6e
    except Exception:
        pass
    return None


def _pick_dc_block(dc: int, target: int = 512) -> int:
    """Largest Dc chunk <= target that divides Dc and is a multiple of 128."""
    if dc <= target:
        return dc
    for blk in range(target, 127, -128):
        if dc % blk == 0:
            return blk
    return dc


# ---------------------------------------------------------------------------
# kernel
# ---------------------------------------------------------------------------
def _layernorm(x, gamma, beta, eps=1e-5):
    mu = jnp.mean(x, axis=-1, keepdims=True)
    var = jnp.mean((x - mu) ** 2, axis=-1, keepdims=True)
    return (x - mu) * jax.lax.rsqrt(var + eps) * gamma + beta


def dwt_mixer_kernel(
    x_ref,     # (S, F)        f32   token rows of one batch element
    wb_ref,    # (F, H)        bf16  bottleneck Linear
    wt1t_ref,  # (Dt, S)       bf16  token-mix MLP W1^T
    wt2t_ref,  # (S, Dt)       bf16  token-mix MLP W2^T
    wc1_ref,   # (H, dc_blk)   bf16  channel-mix W1 chunk
    wc2_ref,   # (dc_blk, H)   bf16  channel-mix W2 chunk
    hvec_ref,  # (6, H)        f32   [bb, ln1g, ln1b, ln2g, ln2b, bc2]
    bc1_ref,   # (1, dc_blk)   f32   channel-mix b1 chunk
    col_ref,   # (Dt+S, 1)     f32   [bt1 column ; bt2 column]
    o_ref,     # (1, 1, H)     f32   pooled token sums for this batch element
    h_scr,     # (S, H)        f32   hidden after token mixing (persists over d)
    y2_scr,    # (S, H)        bf16  LayerNorm'd channel-mix input
    acc_scr,   # (S, H)        f32   channel-mix accumulator
    *,
    act_dtype,
):
    d = pl.program_id(1)
    n_dc = pl.num_programs(1)
    S, _ = x_ref.shape
    Dt = wt1t_ref.shape[0]
    f32, bf16 = jnp.float32, jnp.bfloat16

    hv = hvec_ref[...]
    bb, ln1g, ln1b, ln2g, ln2b, bc2 = (hv[i:i + 1, :] for i in range(6))

    # ---- once per batch element (first Dc step): bottleneck + token mixing ----
    @pl.when(d == 0)
    def _():
        col = col_ref[...]
        bt1c = col[0:Dt, :]          # (Dt, 1)
        bt2c = col[Dt:Dt + S, :]     # (S, 1)

        h = jnp.dot(x_ref[...].astype(bf16), wb_ref[...],
                    preferred_element_type=f32) + bb                  # (S, H)
        y = _layernorm(h, ln1g, ln1b).astype(bf16)
        u = jnp.dot(wt1t_ref[...], y, preferred_element_type=f32) + bt1c   # (Dt, H)
        u = jax.nn.gelu(u.astype(act_dtype)).astype(bf16)
        t = jnp.dot(wt2t_ref[...], u, preferred_element_type=f32) + bt2c   # (S, H)
        h = h + t

        h_scr[...] = h
        y2_scr[...] = _layernorm(h, ln2g, ln2b).astype(bf16)
        acc_scr[...] = jnp.zeros_like(acc_scr)

    # ---- every Dc step: one chunk of the channel-mix MLP, accumulated ----
    c = jnp.dot(y2_scr[...], wc1_ref[...], preferred_element_type=f32) + bc1_ref[...]
    c = jax.nn.gelu(c.astype(act_dtype)).astype(bf16)
    acc_scr[...] += jnp.dot(c, wc2_ref[...], preferred_element_type=f32)

    # ---- finalize: residual + bias, pool token SUMS (1/S folded into wcls) ----
    @pl.when(d == n_dc - 1)
    def _():
        h = h_scr[...] + acc_scr[...] + bc2
        o_ref[0] = jnp.sum(h, axis=0, keepdims=True).astype(o_ref.dtype)


# ---------------------------------------------------------------------------
# wrapper
# ---------------------------------------------------------------------------
def dwt_mixer_seq_cls(x, p):
    """x: (B, S, F) float32.  Returns logits (B, C)."""
    B, S, F = x.shape
    H = p["wb"].shape[1]
    Dt = p["wt1t"].shape[0]
    Dc = p["wc1"].shape[1]

    dc_blk = _pick_dc_block(Dc)
    assert Dc % dc_blk == 0
    n_dc = Dc // dc_blk

    x2 = x.reshape(B * S, F).astype(jnp.float32)   # host-side flatten, no in-kernel reshape

    kernel = functools.partial(dwt_mixer_kernel, act_dtype=_act_dtype())

    cp_kwargs = dict(dimension_semantics=("parallel", "arbitrary"))
    vmem_limit = _vmem_limit_bytes()
    if vmem_limit is not None:
        cp_kwargs["vmem_limit_bytes"] = vmem_limit

    const = lambda shape: pl.BlockSpec(shape, lambda b, d: (0, 0))

    pooled3 = pl.pallas_call(
        kernel,
        out_shape=jax.ShapeDtypeStruct((B, 1, H), jnp.float32),
        grid=(B, n_dc),
        in_specs=[
            pl.BlockSpec((S, F), lambda b, d: (b, 0)),         # x rows for batch b
            const((F, H)),                                     # bottleneck W
            const((Dt, S)),                                    # token mlp W1^T
            const((S, Dt)),                                    # token mlp W2^T
            pl.BlockSpec((H, dc_blk), lambda b, d: (0, d)),    # channel mlp W1 chunk
            pl.BlockSpec((dc_blk, H), lambda b, d: (d, 0)),    # channel mlp W2 chunk
            const((6, H)),                                     # packed (1,H) params
            pl.BlockSpec((1, dc_blk), lambda b, d: (0, d)),    # channel mlp b1 chunk
            const((Dt + S, 1)),                                # packed token-mix bias cols
        ],
        out_specs=pl.BlockSpec((1, 1, H), lambda b, d: (b, 0, 0)),
        scratch_shapes=[
            pltpu.VMEM((S, H), jnp.float32),    # h after token mixing
            pltpu.VMEM((S, H), jnp.bfloat16),   # LayerNorm'd channel-mix input
            pltpu.VMEM((S, H), jnp.float32),    # channel-mix accumulator
        ],
        compiler_params=pltpu.CompilerParams(**cp_kwargs),
    )(
        x2,
        p["wb"], p["wt1t"], p["wt2t"], p["wc1"], p["wc2"],
        p["hvecs"], p["bc1"], p["cols"],
    )

    pooled = pooled3[:, 0, :]                              # (B, H) token sums
    # Classification head outside the kernel: one lane-friendly XLA matmul,
    # with the mean-pool's 1/S already folded into wcls_scaled.
    return pooled @ p["wcls_scaled"] + p["bcls"]


# ---------------------------------------------------------------------------
# parameter packing / reference / init
# ---------------------------------------------------------------------------
def prepare_params(m, S):
    """Pack / pre-transpose / downcast the f32 master params for the kernel."""
    bf16, f32 = jnp.bfloat16, jnp.float32
    return {
        "wb": m["wb"].astype(bf16),
        "wt1t": m["wt1"].T.astype(bf16),             # (Dt, S)
        "wt2t": m["wt2"].T.astype(bf16),             # (S, Dt)
        "wc1": m["wc1"].astype(bf16),
        "wc2": m["wc2"].astype(bf16),
        "hvecs": jnp.concatenate(
            [m["bb"], m["ln1g"], m["ln1b"], m["ln2g"], m["ln2b"], m["bc2"]],
            axis=0).astype(f32),                      # (6, H)
        "bc1": m["bc1"].astype(f32),
        "cols": jnp.concatenate([m["bt1"].T, m["bt2"].T], axis=0).astype(f32),
        "wcls_scaled": (m["wcls"] / S).astype(f32),   # fold 1/S mean-pool scale
        "bcls": m["bcls"].astype(f32),
    }


def _reference(x, m, act_dtype):
    """Pure-JAX reference with matching numerics (bf16 MXU operands, f32 accum)."""
    f32, bf16 = jnp.float32, jnp.bfloat16
    cast = lambda a: a.astype(bf16)
    h = jnp.einsum("bsf,fh->bsh", cast(x), cast(m["wb"]),
                   preferred_element_type=f32) + m["bb"]
    y = cast(_layernorm(h, m["ln1g"], m["ln1b"]))
    yt = jnp.swapaxes(y, 1, 2)                                           # (B, H, S)
    t = jnp.einsum("bhs,sd->bhd", yt, cast(m["wt1"]),
                   preferred_element_type=f32) + m["bt1"]
    t = cast(jax.nn.gelu(t.astype(act_dtype)))
    t = jnp.einsum("bhd,ds->bhs", t, cast(m["wt2"]),
                   preferred_element_type=f32) + m["bt2"]
    h = h + jnp.swapaxes(t, 1, 2)
    y = cast(_layernorm(h, m["ln2g"], m["ln2b"]))
    c = jnp.einsum("bsh,hd->bsd", y, cast(m["wc1"]),
                   preferred_element_type=f32) + m["bc1"]
    c = cast(jax.nn.gelu(c.astype(act_dtype)))
    c = jnp.einsum("bsd,dh->bsh", c, cast(m["wc2"]),
                   preferred_element_type=f32) + m["bc2"]
    h = h + c
    pooled = jnp.mean(h, axis=1)                                         # (B, H)
    return pooled @ m["wcls"] + m["bcls"]


def init_params(key, F, H, S, Dt, Dc, C):
    ks = jax.random.split(key, 16)
    n = lambda k, shape, s=0.1: jax.random.normal(k, shape, jnp.float32) * s
    return {
        "wb": n(ks[0], (F, H)),   "bb": n(ks[1], (1, H), 0.05),
        "ln1g": 1.0 + n(ks[2], (1, H), 0.02), "ln1b": n(ks[3], (1, H), 0.02),
        "wt1": n(ks[4], (S, Dt)), "bt1": n(ks[5], (1, Dt), 0.05),
        "wt2": n(ks[6], (Dt, S)), "bt2": n(ks[7], (1, S), 0.05),
        "ln2g": 1.0 + n(ks[8], (1, H), 0.02), "ln2b": n(ks[9], (1, H), 0.02),
        "wc1": n(ks[10], (H, Dc)), "bc1": n(ks[11], (1, Dc), 0.05),
        "wc2": n(ks[12], (Dc, H)), "bc2": n(ks[13], (1, H), 0.05),
        "wcls": n(ks[14], (H, C)), "bcls": n(ks[15], (1, C), 0.05),
    }


if __name__ == "__main__":
    B, S, F = 2, 8, 32              # batch, sequence length, feature_size
    H, Dt, Dc, C = 32, 32, 64, 4    # hidden_dim, token/channel MLP dims, classes

    key = jax.random.PRNGKey(0)
    k_x, k_p = jax.random.split(key)
    x = jax.random.normal(k_x, (B, S, F), jnp.float32)
    master = init_params(k_p, F, H, S, Dt, Dc, C)
    params = prepare_params(master, S)

    fwd = jax.jit(dwt_mixer_seq_cls)
    logits = jax.block_until_ready(fwd(x, params))

    ref = _reference(x, master, _act_dtype())
    assert logits.shape == (B, C)
    assert bool(jnp.all(jnp.isfinite(logits)))
    assert bool(jnp.allclose(logits, ref, rtol=1e-2, atol=1e-2)), (logits, ref)

    print("KERNEL_OK")
</pallas_src>

<mosaic_0001>
module attributes {stable_mosaic.version = 11 : i64} {
  func.func @dwt_mixer_kernel(%arg0: i32, %arg1: i32, %arg2: memref<8x32xf32, #tpu.memory_space<vmem>>, %arg3: memref<32x32xbf16, #tpu.memory_space<vmem>>, %arg4: memref<32x8xbf16, #tpu.memory_space<vmem>>, %arg5: memref<8x32xbf16, #tpu.memory_space<vmem>>, %arg6: memref<32x64xbf16, #tpu.memory_space<vmem>>, %arg7: memref<64x32xbf16, #tpu.memory_space<vmem>>, %arg8: memref<6x32xf32, #tpu.memory_space<vmem>>, %arg9: memref<1x64xf32, #tpu.memory_space<vmem>>, %arg10: memref<40x1xf32, #tpu.memory_space<vmem>>, %arg11: memref<1x1x32xf32, #tpu.memory_space<vmem>>, %arg12: memref<8x32xf32, #tpu.memory_space<vmem>>, %arg13: memref<8x32xbf16, #tpu.memory_space<vmem>>, %arg14: memref<8x32xf32, #tpu.memory_space<vmem>>) attributes {dimension_semantics = [#tpu.dimension_semantics<parallel>, #tpu.dimension_semantics<arbitrary>], iteration_bounds = array<i64: 2, 1>, scalar_prefetch = 0 : i64, scratch_operands = 3 : i64, tpu.core_type = #tpu.core_type<tc>, window_params = [{transform_indices = @transform_0, window_bounds = array<i64: 8, 32>}, {pipeline_mode = #tpu.pipeline_mode<synchronous>, transform_indices = @transform_1, window_bounds = array<i64: 32, 32>}, {pipeline_mode = #tpu.pipeline_mode<synchronous>, transform_indices = @transform_2, window_bounds = array<i64: 32, 8>}, {pipeline_mode = #tpu.pipeline_mode<synchronous>, transform_indices = @transform_3, window_bounds = array<i64: 8, 32>}, {transform_indices = @transform_4, window_bounds = array<i64: 32, 64>}, {transform_indices = @transform_5, window_bounds = array<i64: 64, 32>}, {pipeline_mode = #tpu.pipeline_mode<synchronous>, transform_indices = @transform_6, window_bounds = array<i64: 6, 32>}, {transform_indices = @transform_7, window_bounds = array<i64: 1, 64>}, {pipeline_mode = #tpu.pipeline_mode<synchronous>, transform_indices = @transform_8, window_bounds = array<i64: 40, 1>}, {transform_indices = @transform_9, window_bounds = array<i64: 1, 1, 32>}]} {
    %c0 = arith.constant 0 : index
    %c0_0 = arith.constant 0 : index
    %0 = vector.load %arg8[%c0, %c0_0] : memref<6x32xf32, #tpu.memory_space<vmem>>, vector<6x32xf32>
    %1 = vector.extract_strided_slice %0 {offsets = [0, 0], sizes = [1, 32], strides = [1, 1]} : vector<6x32xf32> to vector<1x32xf32>
    %2 = vector.extract_strided_slice %0 {offsets = [1, 0], sizes = [1, 32], strides = [1, 1]} : vector<6x32xf32> to vector<1x32xf32>
    %3 = vector.extract_strided_slice %0 {offsets = [2, 0], sizes = [1, 32], strides = [1, 1]} : vector<6x32xf32> to vector<1x32xf32>
    %4 = vector.extract_strided_slice %0 {offsets = [3, 0], sizes = [1, 32], strides = [1, 1]} : vector<6x32xf32> to vector<1x32xf32>
    %5 = vector.extract_strided_slice %0 {offsets = [4, 0], sizes = [1, 32], strides = [1, 1]} : vector<6x32xf32> to vector<1x32xf32>
    %6 = vector.extract_strided_slice %0 {offsets = [5, 0], sizes = [1, 32], strides = [1, 1]} : vector<6x32xf32> to vector<1x32xf32>
    %c0_i32 = arith.constant 0 : i32
    %7 = arith.cmpi eq, %arg1, %c0_i32 : i32
    %8 = arith.extui %7 : i1 to i32
    %c0_i32_1 = arith.constant 0 : i32
    %9 = arith.cmpi ne, %8, %c0_i32_1 : i32
    scf.if %9 {
      %c0_21 = arith.constant 0 : index
      %c0_22 = arith.constant 0 : index
      %38 = vector.load %arg10[%c0_21, %c0_22] : memref<40x1xf32, #tpu.memory_space<vmem>>, vector<40x1xf32>
      %39 = vector.extract_strided_slice %38 {offsets = [0, 0], sizes = [32, 1], strides = [1, 1]} : vector<40x1xf32> to vector<32x1xf32>
      %40 = vector.extract_strided_slice %38 {offsets = [32, 0], sizes = [8, 1], strides = [1, 1]} : vector<40x1xf32> to vector<8x1xf32>
      %c0_23 = arith.constant 0 : index
      %c0_24 = arith.constant 0 : index
      %41 = vector.load %arg2[%c0_23, %c0_24] : memref<8x32xf32, #tpu.memory_space<vmem>>, vector<8x32xf32>
      %42 = arith.truncf %41 : vector<8x32xf32> to vector<8x32xbf16>
      %c0_25 = arith.constant 0 : index
      %c0_26 = arith.constant 0 : index
      %43 = vector.load %arg3[%c0_25, %c0_26] : memref<32x32xbf16, #tpu.memory_space<vmem>>, vector<32x32xbf16>
      %cst_27 = arith.constant dense<0.000000e+00> : vector<8x32xf32>
      %44 = tpu.matmul %42, %43, %cst_27 {dimension_numbers = #tpu.dot_dimension_numbers<[1], [0], [0], [1], [0, 0, 1, 1], [], []>} : vector<8x32xbf16>, vector<32x32xbf16>, vector<8x32xf32> -> vector<8x32xf32>
      %45 = vector.broadcast %1 : vector<1x32xf32> to vector<8x32xf32>
      %46 = arith.addf %44, %45 : vector<8x32xf32>
      %cst_28 = arith.constant dense<0.000000e+00> : vector<8xf32>
      %47 = vector.multi_reduction <add>, %46, %cst_28 [1] : vector<8x32xf32> to vector<8xf32>
      %48 = vector.shape_cast %47 : vector<8xf32> to vector<8x1xf32>
      %cst_29 = arith.constant 3.200000e+01 : f32
      %49 = vector.broadcast %cst_29 : f32 to vector<8x1xf32>
      %50 = arith.divf %48, %49 : vector<8x1xf32>
      %51 = vector.broadcast %50 : vector<8x1xf32> to vector<8x32xf32>
      %52 = arith.subf %46, %51 : vector<8x32xf32>
      %53 = arith.mulf %52, %52 : vector<8x32xf32>
      %cst_30 = arith.constant dense<0.000000e+00> : vector<8xf32>
      %54 = vector.multi_reduction <add>, %53, %cst_30 [1] : vector<8x32xf32> to vector<8xf32>
      %55 = vector.shape_cast %54 : vector<8xf32> to vector<8x1xf32>
      %cst_31 = arith.constant 3.200000e+01 : f32
      %56 = vector.broadcast %cst_31 : f32 to vector<8x1xf32>
      %57 = arith.divf %55, %56 : vector<8x1xf32>
      %58 = vector.broadcast %50 : vector<8x1xf32> to vector<8x32xf32>
      %59 = arith.subf %46, %58 : vector<8x32xf32>
      %cst_32 = arith.constant 9.99999974E-6 : f32
      %60 = vector.broadcast %cst_32 : f32 to vector<8x1xf32>
      %61 = arith.addf %57, %60 : vector<8x1xf32>
      %62 = math.rsqrt %61 : vector<8x1xf32>
      %63 = vector.broadcast %62 : vector<8x1xf32> to vector<8x32xf32>
      %64 = arith.mulf %59, %63 : vector<8x32xf32>
      %65 = vector.broadcast %2 : vector<1x32xf32> to vector<8x32xf32>
      %66 = arith.mulf %64, %65 : vector<8x32xf32>
      %67 = vector.broadcast %3 : vector<1x32xf32> to vector<8x32xf32>
      %68 = arith.addf %66, %67 : vector<8x32xf32>
      %69 = arith.truncf %68 : vector<8x32xf32> to vector<8x32xbf16>
      %c0_33 = arith.constant 0 : index
      %c0_34 = arith.constant 0 : index
      %70 = vector.load %arg4[%c0_33, %c0_34] : memref<32x8xbf16, #tpu.memory_space<vmem>>, vector<32x8xbf16>
      %cst_35 = arith.constant dense<0.000000e+00> : vector<32x32xf32>
      %71 = tpu.matmul %70, %69, %cst_35 {dimension_numbers = #tpu.dot_dimension_numbers<[1], [0], [0], [1], [0, 0, 1, 1], [], []>} : vector<32x8xbf16>, vector<8x32xbf16>, vector<32x32xf32> -> vector<32x32xf32>
      %72 = vector.broadcast %39 : vector<32x1xf32> to vector<32x32xf32>
      %73 = arith.addf %71, %72 : vector<32x32xf32>
      %74 = arith.mulf %73, %73 : vector<32x32xf32>
      %75 = arith.mulf %73, %74 : vector<32x32xf32>
      %cst_36 = arith.constant 4.471500e-02 : f32
      %76 = vector.broadcast %cst_36 : f32 to vector<32x32xf32>
      %77 = arith.mulf %76, %75 : vector<32x32xf32>
      %78 = arith.addf %73, %77 : vector<32x32xf32>
      %cst_37 = arith.constant 0.797884583 : f32
      %79 = vector.broadcast %cst_37 : f32 to vector<32x32xf32>
      %80 = arith.mulf %79, %78 : vector<32x32xf32>
      %81 = math.tanh %80 : vector<32x32xf32>
      %cst_38 = arith.constant 1.000000e+00 : f32
      %82 = vector.broadcast %cst_38 : f32 to vector<32x32xf32>
      %83 = arith.addf %82, %81 : vector<32x32xf32>
      %cst_39 = arith.constant 5.000000e-01 : f32
      %84 = vector.broadcast %cst_39 : f32 to vector<32x32xf32>
      %85 = arith.mulf %84, %83 : vector<32x32xf32>
      %86 = arith.mulf %73, %85 : vector<32x32xf32>
      %87 = arith.truncf %86 : vector<32x32xf32> to vector<32x32xbf16>
      %c0_40 = arith.constant 0 : index
      %c0_41 = arith.constant 0 : index
      %88 = vector.load %arg5[%c0_40, %c0_41] : memref<8x32xbf16, #tpu.memory_space<vmem>>, vector<8x32xbf16>
      %cst_42 = arith.constant dense<0.000000e+00> : vector<8x32xf32>
      %89 = tpu.matmul %88, %87, %cst_42 {dimension_numbers = #tpu.dot_dimension_numbers<[1], [0], [0], [1], [0, 0, 1, 1], [], []>} : vector<8x32xbf16>, vector<32x32xbf16>, vector<8x32xf32> -> vector<8x32xf32>
      %90 = vector.broadcast %40 : vector<8x1xf32> to vector<8x32xf32>
      %91 = arith.addf %89, %90 : vector<8x32xf32>
      %92 = arith.addf %46, %91 : vector<8x32xf32>
      %c0_43 = arith.constant 0 : index
      %c0_44 = arith.constant 0 : index
      %93 = vector.load %arg12[%c0_43, %c0_44] : memref<8x32xf32, #tpu.memory_space<vmem>>, vector<8x32xf32>
      tpu.vector_store %arg12[%c0_43, %c0_44], %92 {strides = array<i32>} : memref<8x32xf32, #tpu.memory_space<vmem>>, vector<8x32xf32>,
      %cst_45 = arith.constant dense<0.000000e+00> : vector<8xf32>
      %94 = vector.multi_reduction <add>, %92, %cst_45 [1] : vector<8x32xf32> to vector<8xf32>
      %95 = vector.shape_cast %94 : vector<8xf32> to vector<8x1xf32>
      %cst_46 = arith.constant 3.200000e+01 : f32
      %96 = vector.broadcast %cst_46 : f32 to vector<8x1xf32>
      %97 = arith.divf %95, %96 : vector<8x1xf32>
      %98 = vector.broadcast %97 : vector<8x1xf32> to vector<8x32xf32>
      %99 = arith.subf %92, %98 : vector<8x32xf32>
      %100 = arith.mulf %99, %99 : vector<8x32xf32>
      %cst_47 = arith.constant dense<0.000000e+00> : vector<8xf32>
      %101 = vector.multi_reduction <add>, %100, %cst_47 [1] : vector<8x32xf32> to vector<8xf32>
      %102 = vector.shape_cast %101 : vector<8xf32> to vector<8x1xf32>
      %cst_48 = arith.constant 3.200000e+01 : f32
      %103 = vector.broadcast %cst_48 : f32 to vector<8x1xf32>
      %104 = arith.divf %102, %103 : vector<8x1xf32>
      %105 = vector.broadcast %97 : vector<8x1xf32> to vector<8x32xf32>
      %106 = arith.subf %92, %105 : vector<8x32xf32>
      %cst_49 = arith.constant 9.99999974E-6 : f32
      %107 = vector.broadcast %cst_49 : f32 to vector<8x1xf32>
      %108 = arith.addf %104, %107 : vector<8x1xf32>
      %109 = math.rsqrt %108 : vector<8x1xf32>
      %110 = vector.broadcast %109 : vector<8x1xf32> to vector<8x32xf32>
      %111 = arith.mulf %106, %110 : vector<8x32xf32>
      %112 = vector.broadcast %4 : vector<1x32xf32> to vector<8x32xf32>
      %113 = arith.mulf %111, %112 : vector<8x32xf32>
      %114 = vector.broadcast %5 : vector<1x32xf32> to vector<8x32xf32>
      %115 = arith.addf %113, %114 : vector<8x32xf32>
      %116 = arith.truncf %115 : vector<8x32xf32> to vector<8x32xbf16>
      %c0_50 = arith.constant 0 : index
      %c0_51 = arith.constant 0 : index
      %117 = vector.load %arg13[%c0_50, %c0_51] : memref<8x32xbf16, #tpu.memory_space<vmem>>, vector<8x32xbf16>
      tpu.vector_store %arg13[%c0_50, %c0_51], %116 {strides = array<i32>} : memref<8x32xbf16, #tpu.memory_space<vmem>>, vector<8x32xbf16>,
      %cst_52 = arith.constant 0.000000e+00 : f32
      %118 = vector.broadcast %cst_52 : f32 to vector<8x32xf32>
      %c0_53 = arith.constant 0 : index
      %c0_54 = arith.constant 0 : index
      %119 = vector.load %arg14[%c0_53, %c0_54] : memref<8x32xf32, #tpu.memory_space<vmem>>, vector<8x32xf32>
      tpu.vector_store %arg14[%c0_53, %c0_54], %118 {strides = array<i32>} : memref<8x32xf32, #tpu.memory_space<vmem>>, vector<8x32xf32>,
    } else {
    }
    %c0_2 = arith.constant 0 : index
    %c0_3 = arith.constant 0 : index
    %10 = vector.load %arg13[%c0_2, %c0_3] : memref<8x32xbf16, #tpu.memory_space<vmem>>, vector<8x32xbf16>
    %c0_4 = arith.constant 0 : index
    %c0_5 = arith.constant 0 : index
    %11 = vector.load %arg6[%c0_4, %c0_5] : memref<32x64xbf16, #tpu.memory_space<vmem>>, vector<32x64xbf16>
    %cst = arith.constant dense<0.000000e+00> : vector<8x64xf32>
    %12 = tpu.matmul %10, %11, %cst {dimension_numbers = #tpu.dot_dimension_numbers<[1], [0], [0], [1], [0, 0, 1, 1], [], []>} : vector<8x32xbf16>, vector<32x64xbf16>, vector<8x64xf32> -> vector<8x64xf32>
    %c0_6 = arith.constant 0 : index
    %c0_7 = arith.constant 0 : index
    %13 = vector.load %arg9[%c0_6, %c0_7] : memref<1x64xf32, #tpu.memory_space<vmem>>, vector<1x64xf32>
    %14 = vector.broadcast %13 : vector<1x64xf32> to vector<8x64xf32>
    %15 = arith.addf %12, %14 : vector<8x64xf32>
    %16 = arith.mulf %15, %15 : vector<8x64xf32>
    %17 = arith.mulf %15, %16 : vector<8x64xf32>
    %cst_8 = arith.constant 4.471500e-02 : f32
    %18 = vector.broadcast %cst_8 : f32 to vector<8x64xf32>
    %19 = arith.mulf %18, %17 : vector<8x64xf32>
    %20 = arith.addf %15, %19 : vector<8x64xf32>
    %cst_9 = arith.constant 0.797884583 : f32
    %21 = vector.broadcast %cst_9 : f32 to vector<8x64xf32>
    %22 = arith.mulf %21, %20 : vector<8x64xf32>
    %23 = math.tanh %22 : vector<8x64xf32>
    %cst_10 = arith.constant 1.000000e+00 : f32
    %24 = vector.broadcast %cst_10 : f32 to vector<8x64xf32>
    %25 = arith.addf %24, %23 : vector<8x64xf32>
    %cst_11 = arith.constant 5.000000e-01 : f32
    %26 = vector.broadcast %cst_11 : f32 to vector<8x64xf32>
    %27 = arith.mulf %26, %25 : vector<8x64xf32>
    %28 = arith.mulf %15, %27 : vector<8x64xf32>
    %29 = arith.truncf %28 : vector<8x64xf32> to vector<8x64xbf16>
    %c0_12 = arith.constant 0 : index
    %c0_13 = arith.constant 0 : index
    %30 = vector.load %arg14[%c0_12, %c0_13] : memref<8x32xf32, #tpu.memory_space<vmem>>, vector<8x32xf32>
    %c0_14 = arith.constant 0 : index
    %c0_15 = arith.constant 0 : index
    %31 = vector.load %arg7[%c0_14, %c0_15] : memref<64x32xbf16, #tpu.memory_space<vmem>>, vector<64x32xbf16>
    %cst_16 = arith.constant dense<0.000000e+00> : vector<8x32xf32>
    %32 = tpu.matmul %29, %31, %cst_16 {dimension_numbers = #tpu.dot_dimension_numbers<[1], [0], [0], [1], [0, 0, 1, 1], [], []>} : vector<8x64xbf16>, vector<64x32xbf16>, vector<8x32xf32> -> vector<8x32xf32>
    %33 = arith.addf %30, %32 : vector<8x32xf32>
    %c0_17 = arith.constant 0 : index
    %c0_18 = arith.constant 0 : index
    %34 = vector.load %arg14[%c0_17, %c0_18] : memref<8x32xf32, #tpu.memory_space<vmem>>, vector<8x32xf32>
    tpu.vector_store %arg14[%c0_17, %c0_18], %33 {strides = array<i32>} : memref<8x32xf32, #tpu.memory_space<vmem>>, vector<8x32xf32>,
    %c0_i32_19 = arith.constant 0 : i32
    %35 = arith.cmpi eq, %arg1, %c0_i32_19 : i32
    %36 = arith.extui %35 : i1 to i32
    %c0_i32_20 = arith.constant 0 : i32
    %37 = arith.cmpi ne, %36, %c0_i32_20 : i32
    scf.if %37 {
      %c0_21 = arith.constant 0 : index
      %c0_22 = arith.constant 0 : index
      %38 = vector.load %arg12[%c0_21, %c0_22] : memref<8x32xf32, #tpu.memory_space<vmem>>, vector<8x32xf32>
      %c0_23 = arith.constant 0 : index
      %c0_24 = arith.constant 0 : index
      %39 = vector.load %arg14[%c0_23, %c0_24] : memref<8x32xf32, #tpu.memory_space<vmem>>, vector<8x32xf32>
      %40 = arith.addf %38, %39 : vector<8x32xf32>
      %41 = vector.broadcast %6 : vector<1x32xf32> to vector<8x32xf32>
      %42 = arith.addf %40, %41 : vector<8x32xf32>
      %cst_25 = arith.constant dense<0.000000e+00> : vector<32xf32>
      %43 = vector.multi_reduction <add>, %42, %cst_25 [0] : vector<8x32xf32> to vector<32xf32>
      %44 = vector.shape_cast %43 : vector<32xf32> to vector<1x32xf32>
      %c0_26 = arith.constant 0 : index
      %c0_27 = arith.constant 0 : index
      %c0_28 = arith.constant 0 : index
      %45 = vector.load %arg11[%c0_26, %c0_27, %c0_28] : memref<1x1x32xf32, #tpu.memory_space<vmem>>, vector<1x1x32xf32>
      %46 = vector.shape_cast %45 : vector<1x1x32xf32> to vector<1x32xf32>
      %47 = vector.shape_cast %44 : vector<1x32xf32> to vector<1x1x32xf32>
      tpu.vector_store %arg11[%c0_26, %c0_27, %c0_28], %47 {strides = array<i32>} : memref<1x1x32xf32, #tpu.memory_space<vmem>>, vector<1x1x32xf32>,
    } else {
    }
    return
  }
  func.func @transform_0(%arg0: i32, %arg1: i32) -> (i32, i32) {
    %c0_i32 = arith.constant 0 : i32
    %c0_i32_0 = arith.constant 0 : i32
    return %arg0, %c0_i32 : i32, i32
  }
  func.func @transform_1(%arg0: i32, %arg1: i32) -> (i32, i32) {
    %c0_i32 = arith.constant 0 : i32
    %c0_i32_0 = arith.constant 0 : i32
    %c0_i32_1 = arith.constant 0 : i32
    return %c0_i32, %c0_i32_0 : i32, i32
  }
  func.func @transform_2(%arg0: i32, %arg1: i32) -> (i32, i32) {
    %c0_i32 = arith.constant 0 : i32
    %c0_i32_0 = arith.constant 0 : i32
    %c0_i32_1 = arith.constant 0 : i32
    return %c0_i32, %c0_i32_0 : i32, i32
  }
  func.func @transform_3(%arg0: i32, %arg1: i32) -> (i32, i32) {
    %c0_i32 = arith.constant 0 : i32
    %c0_i32_0 = arith.constant 0 : i32
    %c0_i32_1 = arith.constant 0 : i32
    return %c0_i32, %c0_i32_0 : i32, i32
  }
  func.func @transform_4(%arg0: i32, %arg1: i32) -> (i32, i32) {
    %c0_i32 = arith.constant 0 : i32
    %c0_i32_0 = arith.constant 0 : i32
    return %c0_i32, %arg1 : i32, i32
  }
  func.func @transform_5(%arg0: i32, %arg1: i32) -> (i32, i32) {
    %c0_i32 = arith.constant 0 : i32
    %c0_i32_0 = arith.constant 0 : i32
    return %arg1, %c0_i32 : i32, i32
  }
  func.func @transform_6(%arg0: i32, %arg1: i32) -> (i32, i32) {
    %c0_i32 = arith.constant 0 : i32
    %c0_i32_0 = arith.constant 0 : i32
    %c0_i32_1 = arith.constant 0 : i32
    return %c0_i32, %c0_i32_0 : i32, i32
  }
  func.func @transform_7(%arg0: i32, %arg1: i32) -> (i32, i32) {
    %c0_i32 = arith.constant 0 : i32
    %c0_i32_0 = arith.constant 0 : i32
    return %c0_i32, %arg1 : i32, i32
  }
  func.func @transform_8(%arg0: i32, %arg1: i32) -> (i32, i32) {
    %c0_i32 = arith.constant 0 : i32
    %c0_i32_0 = arith.constant 0 : i32
    %c0_i32_1 = arith.constant 0 : i32
    return %c0_i32, %c0_i32_0 : i32, i32
  }
  func.func @transform_9(%arg0: i32, %arg1: i32) -> (i32, i32, i32) {
    %c0_i32 = arith.constant 0 : i32
    %c0_i32_0 = arith.constant 0 : i32
    %c0_i32_1 = arith.constant 0 : i32
    return %arg0, %c0_i32, %c0_i32_0 : i32, i32, i32
  }
}

</mosaic_0001>

<llo_original>
// kernel: dwt_mixer_seq_cls.1
$region0: #{dwt_mixer_seq_cls.1}
  #allocation0 [shape = 'u32[]', space=smem, size = 0x4, offset = 0x4, fixed_abs, tag = 'smem constant byte address 0x4 - core index']
  #allocation1 [shape = 'u32[144,128]{1,0:T(1,128)}', space=vmem, size = 0x12000, scoped, tag = 'internal scratch']
  #allocation2 [shape = 'f32[8,32]{1,0:T(8,128)}', space=vmem, size = 0x1000, scoped, tag = 'scratch operand']
  #allocation3 [shape = 'bf16[8,32]{1,0:T(8,128)(2,1)}', space=vmem, size = 0x800, scoped, tag = 'scratch operand']
  #allocation4 [shape = 'f32[8,32]{1,0:T(8,128)}', space=vmem, size = 0x1000, scoped, tag = 'scratch operand']
  %s0 = inlined_call_operand.vmem [shape: f32[16,32], index: 0, kind: input, shape index: {}]
  %s1 = inlined_call_operand.vmem [shape: bf16[32,32], index: 1, kind: input, shape index: {}]
  %s2 = inlined_call_operand.vmem [shape: bf16[32,8], index: 2, kind: input, shape index: {}]
  %s3 = inlined_call_operand.vmem [shape: bf16[8,32], index: 3, kind: input, shape index: {}]
  %s4 = inlined_call_operand.vmem [shape: bf16[32,64], index: 4, kind: input, shape index: {}]
  %s5 = inlined_call_operand.vmem [shape: bf16[64,32], index: 5, kind: input, shape index: {}]
  %s6 = inlined_call_operand.vmem [shape: f32[6,32], index: 6, kind: input, shape index: {}]
  %s7 = inlined_call_operand.vmem [shape: f32[1,64], index: 7, kind: input, shape index: {}]
  %s8 = inlined_call_operand.vmem [shape: f32[40,1], index: 8, kind: input, shape index: {}]
  %s9 = inlined_call_operand.vmem [shape: f32[2,1,32], index: 9, kind: output, shape index: {}]
  %s10 = sld [smem:[#allocation0]]
  $region77: #{dwt_mixer_seq_cls.1} parent=0
    _
  %s12 = ssub.s32 1, %s10
  %s13 = scalar_select 0, %s12, %s10
  loop: start=0, step=1, limit=4
  $region2: #{dwt_mixer_seq_cls.1} parent=0 // loop_pre_header
    _
  $region3: #{dwt_mixer_seq_cls.1} parent=0 // loop_header
    %s15 = sphi 0, %s19
    %p16 = scmp.ge.s32.totalorder %s15, 4
    %s22 = sphi 0, %s34
    %s23 = sphi 0, %s30
    %s24 = sphi 0, %s22
    %s25 = sphi 0, %s23
    %s26 = sphi 0, %s24
    %s27 = sphi 0, %s25
    %s37 = sphi 0, %s39
    %s40 = sphi 0, %s37
    %s41 = sphi 0, %s40
    %s57 = sphi 0, %s41
    %s61 = sphi 0, %s61
    %s63 = sphi 0, %s61
    %s64 = sphi 0, %s63
    %s78 = sphi 0, %s64
    %s82 = sphi 0, %s82
    %s84 = sphi 0, %s82
    %s85 = sphi 0, %s84
    %s99 = sphi 0, %s85
    %s103 = sphi 0, %s103
    %s105 = sphi 0, %s103
    %s106 = sphi 0, %s105
    %s120 = sphi 0, %s106
    %s126 = sphi 0, %s128
    %s129 = sphi 0, %s126
    %s130 = sphi 0, %s129
    %s146 = sphi 0, %s130
    %s152 = sphi 0, %s154
    %s155 = sphi 0, %s152
    %s156 = sphi 0, %s155
    %s172 = sphi 0, %s156
    %s176 = sphi 0, %s176
    %s178 = sphi 0, %s176
    %s179 = sphi 0, %s178
    %s193 = sphi 0, %s179
    %s199 = sphi 0, %s201
    %s202 = sphi 0, %s199
    %s203 = sphi 0, %s202
    %s219 = sphi 0, %s203
    %s223 = sphi 0, %s223
    %s225 = sphi 0, %s223
    %s226 = sphi 0, %s225
    %s240 = sphi 0, %s226
    %s246 = sphi 0, %s248
    %s249 = sphi 0, %s246
    %s250 = sphi 0, %s249
    %s266 = sphi 0, %s250
  $region4: #{dwt_mixer_seq_cls.1} parent=0 // loop_header_branch
    %18 = sbr.rel (%p16) target = $region8
  $region5: #{dwt_mixer_seq_cls.1} parent=0 // loop_body
    %s20 = ssub.s32 %s15, 1
    %s21 = ssub.s32 %s15, 2
    %s28 = sadd.s32 1, %s23
    %p29 = scmp.ge.s32.totalorder %s28, 1
    %s30 = scalar_select %p29, 0, %s28
    %s31 = sadd.s32 1, %s22
    %s32 = scalar_select %p29, %s31, %s22
    %p33 = scmp.ge.s32.totalorder %s32, 2
    %s34 = scalar_select %p33, 0, %s32
    %s35 = ssub.s32 %s22, %s34
    %p36 = scmp.eq.s32.totalorder %s35, 0
    %s38 = sadd.s32 %s37, 1
    %s39 = scalar_select %p36, %s37, %s38
    %p42 = pneg %p36
    %p43 = scmp.eq.s32.totalorder %s15, 1
    %p44 = por %p42, %p43
    %p45 = scmp.ne.s32.totalorder %s37, %s40
    %p46 = scmp.eq.s32.totalorder %s15, 0
    %p47 = por %p45, %p46
    %p48 = scmp.ne.s32.totalorder %s37, %s40
    %p49 = scmp.eq.s32.totalorder %s20, 1
    %p50 = por %p48, %p49
    %p51 = scmp.ne.s32.totalorder %s40, %s41
    %p52 = scmp.eq.s32.totalorder %s20, 0
    %p53 = por %p51, %p52
    %p54 = scmp.ne.s32.totalorder %s40, %s41
    %p55 = scmp.eq.s32.totalorder %s21, 1
    %p56 = por %p54, %p55
    %p58 = scmp.ne.s32.totalorder %s41, %s57
    %p59 = scmp.eq.s32.totalorder %s21, 0
    %p60 = por %p58, %p59
    %s62 = sadd.s32 %s61, 1
    %p65 = scmp.eq.s32.totalorder %s15, 1
    %p66 = scmp.ne.s32.totalorder %s61, %s63
    %p67 = scmp.eq.s32.totalorder %s15, 0
    %p68 = por %p66, %p67
    %p69 = scmp.ne.s32.totalorder %s61, %s63
    %p70 = scmp.eq.s32.totalorder %s20, 1
    %p71 = por %p69, %p70
    %p72 = scmp.ne.s32.totalorder %s63, %s64
    %p73 = scmp.eq.s32.totalorder %s20, 0
    %p74 = por %p72, %p73
    %p75 = scmp.ne.s32.totalorder %s63, %s64
    %p76 = scmp.eq.s32.totalorder %s21, 1
    %p77 = por %p75, %p76
    %p79 = scmp.ne.s32.totalorder %s64, %s78
    %p80 = scmp.eq.s32.totalorder %s21, 0
    %p81 = por %p79, %p80
    %s83 = sadd.s32 %s82, 1
    %p86 = scmp.eq.s32.totalorder %s15, 1
    %p87 = scmp.ne.s32.totalorder %s82, %s84
    %p88 = scmp.eq.s32.totalorder %s15, 0
    %p89 = por %p87, %p88
    %p90 = scmp.ne.s32.totalorder %s82, %s84
    %p91 = scmp.eq.s32.totalorder %s20, 1
    %p92 = por %p90, %p91
    %p93 = scmp.ne.s32.totalorder %s84, %s85
    %p94 = scmp.eq.s32.totalorder %s20, 0
    %p95 = por %p93, %p94
    %p96 = scmp.ne.s32.totalorder %s84, %s85
    %p97 = scmp.eq.s32.totalorder %s21, 1
    %p98 = por %p96, %p97
    %p100 = scmp.ne.s32.totalorder %s85, %s99
    %p101 = scmp.eq.s32.totalorder %s21, 0
    %p102 = por %p100, %p101
    %s104 = sadd.s32 %s103, 1
    %p107 = scmp.eq.s32.totalorder %s15, 1
    %p108 = scmp.ne.s32.totalorder %s103, %s105
    %p109 = scmp.eq.s32.totalorder %s15, 0
    %p110 = por %p108, %p109
    %p111 = scmp.ne.s32.totalorder %s103, %s105
    %p112 = scmp.eq.s32.totalorder %s20, 1
    %p113 = por %p111, %p112
    %p114 = scmp.ne.s32.totalorder %s105, %s106
    %p115 = scmp.eq.s32.totalorder %s20, 0
    %p116 = por %p114, %p115
    %p117 = scmp.ne.s32.totalorder %s105, %s106
    %p118 = scmp.eq.s32.totalorder %s21, 1
    %p119 = por %p117, %p118
    %p121 = scmp.ne.s32.totalorder %s106, %s120
    %p122 = scmp.eq.s32.totalorder %s21, 0
    %p123 = por %p121, %p122
    %s124 = ssub.s32 %s23, %s30
    %p125 = scmp.eq.s32.totalorder %s124, 0
    %s127 = sadd.s32 %s126, 1
    %s128 = scalar_select %p125, %s126, %s127
    %p131 = pneg %p125
    %p132 = scmp.eq.s32.totalorder %s15, 1
    %p133 = por %p131, %p132
    %p134 = scmp.ne.s32.totalorder %s126, %s129
    %p135 = scmp.eq.s32.totalorder %s15, 0
    %p136 = por %p134, %p135
    %p137 = scmp.ne.s32.totalorder %s126, %s129
    %p138 = scmp.eq.s32.totalorder %s20, 1
    %p139 = por %p137, %p138
    %p140 = scmp.ne.s32.totalorder %s129, %s130
    %p141 = scmp.eq.s32.totalorder %s20, 0
    %p142 = por %p140, %p141
    %p143 = scmp.ne.s32.totalorder %s129, %s130
    %p144 = scmp.eq.s32.totalorder %s21, 1
    %p145 = por %p143, %p144
    %p147 = scmp.ne.s32.totalorder %s130, %s146
    %p148 = scmp.eq.s32.totalorder %s21, 0
    %p149 = por %p147, %p148
    %s150 = ssub.s32 %s23, %s30
    %p151 = scmp.eq.s32.totalorder %s150, 0
    %s153 = sadd.s32 %s152, 1
    %s154 = scalar_select %p151, %s152, %s153
    %p157 = pneg %p151
    %p158 = scmp.eq.s32.totalorder %s15, 1
    %p159 = por %p157, %p158
    %p160 = scmp.ne.s32.totalorder %s152, %s155
    %p161 = scmp.eq.s32.totalorder %s15, 0
    %p162 = por %p160, %p161
    %p163 = scmp.ne.s32.totalorder %s152, %s155
    %p164 = scmp.eq.s32.totalorder %s20, 1
    %p165 = por %p163, %p164
    %p166 = scmp.ne.s32.totalorder %s155, %s156
    %p167 = scmp.eq.s32.totalorder %s20, 0
    %p168 = por %p166, %p167
    %p169 = scmp.ne.s32.totalorder %s155, %s156
    %p170 = scmp.eq.s32.totalorder %s21, 1
    %p171 = por %p169, %p170
    %p173 = scmp.ne.s32.totalorder %s156, %s172
    %p174 = scmp.eq.s32.totalorder %s21, 0
    %p175 = por %p173, %p174
    %s177 = sadd.s32 %s176, 1
    %p180 = scmp.eq.s32.totalorder %s15, 1
    %p181 = scmp.ne.s32.totalorder %s176, %s178
    %p182 = scmp.eq.s32.totalorder %s15, 0
    %p183 = por %p181, %p182
    %p184 = scmp.ne.s32.totalorder %s176, %s178
    %p185 = scmp.eq.s32.totalorder %s20, 1
    %p186 = por %p184, %p185
    %p187 = scmp.ne.s32.totalorder %s178, %s179
    %p188 = scmp.eq.s32.totalorder %s20, 0
    %p189 = por %p187, %p188
    %p190 = scmp.ne.s32.totalorder %s178, %s179
    %p191 = scmp.eq.s32.totalorder %s21, 1
    %p192 = por %p190, %p191
    %p194 = scmp.ne.s32.totalorder %s179, %s193
    %p195 = scmp.eq.s32.totalorder %s21, 0
    %p196 = por %p194, %p195
    %s197 = ssub.s32 %s23, %s30
    %p198 = scmp.eq.s32.totalorder %s197, 0
    %s200 = sadd.s32 %s199, 1
    %s201 = scalar_select %p198, %s199, %s200
    %p204 = pneg %p198
    %p205 = scmp.eq.s32.totalorder %s15, 1
    %p206 = por %p204, %p205
    %p207 = scmp.ne.s32.totalorder %s199, %s202
    %p208 = scmp.eq.s32.totalorder %s15, 0
    %p209 = por %p207, %p208
    %p210 = scmp.ne.s32.totalorder %s199, %s202
    %p211 = scmp.eq.s32.totalorder %s20, 1
    %p212 = por %p210, %p211
    %p213 = scmp.ne.s32.totalorder %s202, %s203
    %p214 = scmp.eq.s32.totalorder %s20, 0
    %p215 = por %p213, %p214
    %p216 = scmp.ne.s32.totalorder %s202, %s203
    %p217 = scmp.eq.s32.totalorder %s21, 1
    %p218 = por %p216, %p217
    %p220 = scmp.ne.s32.totalorder %s203, %s219
    %p221 = scmp.eq.s32.totalorder %s21, 0
    %p222 = por %p220, %p221
    %s224 = sadd.s32 %s223, 1
    %p227 = scmp.eq.s32.totalorder %s15, 1
    %p228 = scmp.ne.s32.totalorder %s223, %s225
    %p229 = scmp.eq.s32.totalorder %s15, 0
    %p230 = por %p228, %p229
    %p231 = scmp.ne.s32.totalorder %s223, %s225
    %p232 = scmp.eq.s32.totalorder %s20, 1
    %p233 = por %p231, %p232
    %p234 = scmp.ne.s32.totalorder %s225, %s226
    %p235 = scmp.eq.s32.totalorder %s20, 0
    %p236 = por %p234, %p235
    %p237 = scmp.ne.s32.totalorder %s225, %s226
    %p238 = scmp.eq.s32.totalorder %s21, 1
    %p239 = por %p237, %p238
    %p241 = scmp.ne.s32.totalorder %s226, %s240
    %p242 = scmp.eq.s32.totalorder %s21, 0
    %p243 = por %p241, %p242
    %s244 = ssub.s32 %s22, %s34
    %p245 = scmp.eq.s32.totalorder %s244, 0
    %s247 = sadd.s32 %s246, 1
    %s248 = scalar_select %p245, %s246, %s247
    %p251 = pneg %p245
    %p252 = scmp.eq.s32.totalorder %s15, 1
    %p253 = por %p251, %p252
    %p254 = scmp.ne.s32.totalorder %s246, %s249
    %p255 = scmp.eq.s32.totalorder %s15, 0
    %p256 = por %p254, %p255
    %p257 = scmp.ne.s32.totalorder %s246, %s249
    %p258 = scmp.eq.s32.totalorder %s20, 1
    %p259 = por %p257, %p258
    %p260 = scmp.ne.s32.totalorder %s249, %s250
    %p261 = scmp.eq.s32.totalorder %s20, 0
    %p262 = por %p260, %p261
    %p263 = scmp.ne.s32.totalorder %s249, %s250
    %p264 = scmp.eq.s32.totalorder %s21, 1
    %p265 = por %p263, %p264
    %p267 = scmp.ne.s32.totalorder %s250, %s266
    %p268 = scmp.eq.s32.totalorder %s21, 0
    %p269 = por %p267, %p268
    %p270 = scmp.le.s32.totalorder 1, %s15
    %p271 = scmp.lt.s32.totalorder %s15, 3
    %p272 = pnand %p270, %p271
    %p273 = pneg %p272
    // Predicated region
    $region9: #{dwt_mixer_seq_cls.1} parent=5 // pred_check
      _
    $region10: #{dwt_mixer_seq_cls.1} parent=5 // pred_check_branch
      %275 = sbr.rel (%p272) target = $region12
    $region11: #{dwt_mixer_seq_cls.1} parent=5 // pred_region
      %s276 = ssub.s32 %s15, 1
      // Predicated region
      $region13: #{dwt_mixer_seq_cls.1} parent=11 // pred_check
        %p277 = pneg %p74
      $region14: #{dwt_mixer_seq_cls.1} parent=11 // pred_check_branch
        %279 = sbr.rel (%p277) target = $region16
      $region15: #{dwt_mixer_seq_cls.1} parent=11 // pred_region
        _
      $region16: #{dwt_mixer_seq_cls.1} parent=11 // pred_fallthru
        _
      // Predicated region
      $region17: #{dwt_mixer_seq_cls.1} parent=11 // pred_check
        %p280 = pneg %p95
      $region18: #{dwt_mixer_seq_cls.1} parent=11 // pred_check_branch
        %282 = sbr.rel (%p280) target = $region20
      $region19: #{dwt_mixer_seq_cls.1} parent=11 // pred_region
        _
      $region20: #{dwt_mixer_seq_cls.1} parent=11 // pred_fallthru
        _
      // Predicated region
      $region21: #{dwt_mixer_seq_cls.1} parent=11 // pred_check
        %p283 = pneg %p116
      $region22: #{dwt_mixer_seq_cls.1} parent=11 // pred_check_branch
        %285 = sbr.rel (%p283) target = $region24
      $region23: #{dwt_mixer_seq_cls.1} parent=11 // pred_region
        _
      $region24: #{dwt_mixer_seq_cls.1} parent=11 // pred_fallthru
        _
      // Predicated region
      $region25: #{dwt_mixer_seq_cls.1} parent=11 // pred_check
        %p286 = pneg %p142
      $region26: #{dwt_mixer_seq_cls.1} parent=11 // pred_check_branch
        %288 = sbr.rel (%p286) target = $region28
      $region27: #{dwt_mixer_seq_cls.1} parent=11 // pred_region
        %p289 = scmp.lt.s32.totalorder %s25, 0
        %s290 = scalar_select %p289, %s25, 0
        %s291 = smul.addr %s290, 4
        %s292 = scalar_lea.vmem %s4, %s291
      $region28: #{dwt_mixer_seq_cls.1} parent=11 // pred_fallthru
        _
      // Predicated region
      $region29: #{dwt_mixer_seq_cls.1} parent=11 // pred_check
        %p293 = pneg %p168
      $region30: #{dwt_mixer_seq_cls.1} parent=11 // pred_check_branch
        %295 = sbr.rel (%p293) target = $region32
      $region31: #{dwt_mixer_seq_cls.1} parent=11 // pred_region
        %s296 = smul.u32 8, %s25
        %p297 = scmp.lt.s32.totalorder %s296, 7
        %s298 = scalar_select %p297, %s296, 7
        %s299 = smul.addr %s298, 4
        %s300 = scalar_lea.vmem %s5, %s299
        %s301 = smul.u32 8, %s25
      $region32: #{dwt_mixer_seq_cls.1} parent=11 // pred_fallthru
        _
      // Predicated region
      $region33: #{dwt_mixer_seq_cls.1} parent=11 // pred_check
        %p302 = pneg %p189
      $region34: #{dwt_mixer_seq_cls.1} parent=11 // pred_check_branch
        %304 = sbr.rel (%p302) target = $region36
      $region35: #{dwt_mixer_seq_cls.1} parent=11 // pred_region
        _
      $region36: #{dwt_mixer_seq_cls.1} parent=11 // pred_fallthru
        _
      // Predicated region
      $region37: #{dwt_mixer_seq_cls.1} parent=11 // pred_check
        %p305 = pneg %p215
      $region38: #{dwt_mixer_seq_cls.1} parent=11 // pred_check_branch
        %307 = sbr.rel (%p305) target = $region40
      $region39: #{dwt_mixer_seq_cls.1} parent=11 // pred_region
        %p308 = scmp.lt.s32.totalorder %s25, 0
        %s309 = scalar_select %p308, %s25, 0
        %s310 = scalar_lea.vmem %s7, %s309
      $region40: #{dwt_mixer_seq_cls.1} parent=11 // pred_fallthru
        _
      // Predicated region
      $region41: #{dwt_mixer_seq_cls.1} parent=11 // pred_check
        %p311 = pneg %p236
      $region42: #{dwt_mixer_seq_cls.1} parent=11 // pred_check_branch
        %313 = sbr.rel (%p311) target = $region44
      $region43: #{dwt_mixer_seq_cls.1} parent=11 // pred_region
        _
      $region44: #{dwt_mixer_seq_cls.1} parent=11 // pred_fallthru
        _
    $region12: #{dwt_mixer_seq_cls.1} parent=5 // pred_fallthru
      _
    %p314 = scmp.lt.s32.totalorder %s15, 2
    // Predicated region
    $region45: #{dwt_mixer_seq_cls.1} parent=5 // pred_check
      %p315 = pneg %p314
    $region46: #{dwt_mixer_seq_cls.1} parent=5 // pred_check_branch
      %317 = sbr.rel (%p315) target = $region48
    $region47: #{dwt_mixer_seq_cls.1} parent=5 // pred_region
      // Predicated region
      $region49: #{dwt_mixer_seq_cls.1} parent=47 // pred_check
        %p318 = pneg %p47
      $region50: #{dwt_mixer_seq_cls.1} parent=47 // pred_check_branch
        %320 = sbr.rel (%p318) target = $region52
      $region51: #{dwt_mixer_seq_cls.1} parent=47 // pred_region
        %p321 = scmp.lt.s32.totalorder %s22, 1
        %s322 = scalar_select %p321, %s22, 1
        %s323 = smul.addr %s322, 8
        %s324 = scalar_lea.vmem %s0, %s323
      $region52: #{dwt_mixer_seq_cls.1} parent=47 // pred_fallthru
        _
    $region48: #{dwt_mixer_seq_cls.1} parent=5 // pred_fallthru
      _
    %p325 = scmp.le.s32.totalorder 1, %s15
    %p326 = scmp.lt.s32.totalorder %s15, 3
    %p327 = pnand %p325, %p326
    %p328 = pneg %p327
    // Predicated region
    $region53: #{dwt_mixer_seq_cls.1} parent=5 // pred_check
      _
    $region54: #{dwt_mixer_seq_cls.1} parent=5 // pred_check_branch
      %330 = sbr.rel (%p327) target = $region56
    $region55: #{dwt_mixer_seq_cls.1} parent=5 // pred_region
      %s331 = ssub.s32 %s15, 1
      %p332 = scmp.lt.s32.totalorder %s24, 1
      %s333 = scalar_select %p332, %s24, 1
      %s334 = smul.addr %s333, 8
      %s335 = scalar_lea.vmem %s0, %s334
      %p336 = pneg %p53
      %p337 = pneg %p50
      %p338 = pneg %p74
      %p339 = pneg %p71
      %p340 = pneg %p95
      %p341 = pneg %p92
      %p342 = pneg %p116
      %p343 = pneg %p113
      %p344 = scmp.lt.s32.totalorder %s25, 0
      %s345 = scalar_select %p344, %s25, 0
      %s346 = smul.addr %s345, 4
      %s347 = scalar_lea.vmem %s4, %s346
      %p348 = pneg %p142
      %p349 = pneg %p139
      %s350 = smul.u32 8, %s25
      %p351 = scmp.lt.s32.totalorder %s350, 7
      %s352 = scalar_select %p351, %s350, 7
      %s353 = smul.addr %s352, 4
      %s354 = scalar_lea.vmem %s5, %s353
      %p355 = pneg %p168
      %p356 = pneg %p165
      %p357 = pneg %p189
      %p358 = pneg %p186
      %p359 = scmp.lt.s32.totalorder %s25, 0
      %s360 = scalar_select %p359, %s25, 0
      %s361 = scalar_lea.vmem %s7, %s360
      %p362 = pneg %p215
      %p363 = pneg %p212
      %p364 = pneg %p236
      %p365 = pneg %p233
      %p366 = pneg %p262
      %p367 = pneg %p259
      %p368 = scmp.lt.s32.totalorder %s24, 1
      %s369 = scalar_select %p368, %s24, 1
      %s370 = scalar_lea.vmem %s9, %s369
      %p371 = scmp.lt.s32.totalorder %s24, 1
      %s372 = scalar_select %p371, %s24, 1
      %s373 = smul.addr %s372, 8
      %s374 = scalar_lea.vmem %s0, %s373
      %p375 = scmp.lt.s32.totalorder %s25, 0
      %s376 = scalar_select %p375, %s25, 0
      %s377 = smul.addr %s376, 4
      %s378 = scalar_lea.vmem %s4, %s377
      %s379 = smul.u32 8, %s25
      %p380 = scmp.lt.s32.totalorder %s379, 7
      %s381 = scalar_select %p380, %s379, 7
      %s382 = smul.addr %s381, 4
      %s383 = scalar_lea.vmem %s5, %s382
      %s384 = smul.u32 8, %s25
      %p385 = scmp.lt.s32.totalorder %s25, 0
      %s386 = scalar_select %p385, %s25, 0
      %s387 = scalar_lea.vmem %s7, %s386
      %p388 = scmp.lt.s32.totalorder %s24, 1
      %s389 = scalar_select %p388, %s24, 1
      %s390 = scalar_lea.vmem %s9, %s389
      %v392 = vld [vmem:[%s6] sm:$0x3f]
      %p393 = scmp.eq.s32.totalorder %s25, 0
      // Predicated region
      $region57: #{dwt_mixer_seq_cls.1} parent=55 // pred_check
        %p394 = pneg %p393
      $region58: #{dwt_mixer_seq_cls.1} parent=55 // pred_check_branch
        %396 = sbr.rel (%p394) target = $region60
      $region59: #{dwt_mixer_seq_cls.1} parent=55 // pred_region
        %v397 = vld [vmem:[%s8] sm:$0xff]
        %v398 = vld [vmem:[%s8 + $0x8] sm:$0xff]
        %v399 = vld [vmem:[%s8 + $0x10] sm:$0xff]
        %v400 = vld [vmem:[%s8 + $0x18] sm:$0xff]
        %v401 = vld [vmem:[%s8 + $0x20] sm:$0xff]
        %v402 = vld [vmem:[%s374] sm:$0xff]
        %v403 = vpack.c.bf16 %v402, %v402
        %v404 = vld [vmem:[%s1] sm:$0xf]
        %v405 = vld [vmem:[%s1 + $0x4] sm:$0xf]
        %v406 = vld [vmem:[%s1 + $0x8] sm:$0xf]
        %v407 = vld [vmem:[%s1 + $0xc] sm:$0xf]
        %v408 = vlaneseq
        %v409 = vshrl.u32 %v408, 7
        %v410 = vsub.s32 0, %v409
        %v411 = vrot.slane %v392, %v410
        %v416 = vunpack.c.l.b16 %v404
        %v417 = vunpack.c.l.b16 %v405
        %v418 = vunpack.c.l.b16 %v406
        %v419 = vunpack.c.l.b16 %v407
        %v420 = vpack.c.b16 %v417, %v416
        %v421 = vpack.c.b16 %v419, %v418
        %vm424 = vcmask 261120
        %v426 = vsel %vm424, %v403, 0
        %428 = vmatprep.subr.bf16.mxu0 0
        %429 = vmatpush1.bf16.msra.mxu0 0
        %430 = vmatprep.subr.bf16.mxu0 0
        %431 = vmatpush1.bf16.msra.mxu0 0
        %432 = vmatprep.subr.bf16.mxu0 0
        %433 = vmatpush1.bf16.msra.mxu0 0
        %434 = vmatprep.subr.bf16.mxu0 0
        %435 = vmatpush1.bf16.msra.mxu0 0
        %436 = vmatprep.subr.bf16.mxu0 0
        %437 = vmatpush1.bf16.msra.mxu0 0
        %438 = vmatprep.subr.bf16.mxu0 0
        %439 = vmatpush1.bf16.msra.mxu0 0
        %440 = vmatprep.subr.bf16.mxu0 0
        %441 = vmatpush1.bf16.msra.mxu0 %v421
        %442 = vmatprep.subr.bf16.mxu0 0
        %443 = vmatpush1.bf16.msra.mxu0 %v420
        %444 = vmatprep.subr.bf16.mxu0 0
        %445 = vmatpush2.bf16.msra.mxu0 0
        %446 = vmatprep.subr.bf16.mxu0 0
        %447 = vmatpush2.bf16.msra.mxu0 0
        %448 = vmatprep.subr.bf16.mxu0 0
        %449 = vmatpush2.bf16.msra.mxu0 0
        %450 = vmatprep.subr.bf16.mxu0 0
        %451 = vmatpush2.bf16.msra.mxu0 0
        %452 = vmatprep.subr.bf16.mxu0 0
        %453 = vmatpush2.bf16.msra.mxu0 0
        %454 = vmatprep.subr.bf16.mxu0 0
        %455 = vmatpush2.bf16.msra.mxu0 0
        %456 = vmatprep.subr.bf16.mxu0 0
        %457 = vmatpush2.bf16.msra.mxu0 0
        %458 = vmatprep.subr.bf16.mxu0 0
        %459 = vmatpush2.bf16.msra.mxu0 0
        %460 = vmatprep.mubr.bf16.mxu0 0
        %461 = vmatmul.mubr.bf16.gmra.mxu0 %v426
        %v462 = vpop.f32.mrf.mxu0
        %v463 = vadd.f32 %v411, %v462
        %v464 = vpop.f32.mrf.mxu0
        %v465 = vpop.f32.mrf.mxu0
        %v466 = vpop.f32.mrf.mxu0
        %467 = vdwg.mxu0
        %v468 = vsel %vm424, %v463, 0.0
        %469 = vadd.xlane.f32.xlu0 %v468
        %v470 = vpop.xlane.xlu0 %469
        %v471 = vrcp.pop 32.0
        %v472 = vmul.f32 %v470, %v471
        %v473 = vsub.f32 %v463, %v472
        %v474 = vmul.f32 %v473, %v473
        %v475 = vsel %vm424, %v474, 0.0
        %476 = vadd.xlane.f32.xlu0 %v475
        %v477 = vpop.xlane.xlu0 %476
        %v478 = vmul.f32 %v477, %v471
        %v479 = vadd.f32 %v478, 1e-05
        %v480 = vrsqrt.pop %v479
        %v481 = vmul.f32 %v473, %v480
        %v482 = vlaneseq
        %v483 = vshrl.u32 %v482, 7
        %v484 = vsub.s32 1, %v483
        %v485 = vrot.slane %v392, %v484
        %v486 = vmul.f32 %v481, %v485
        %v487 = vlaneseq
        %v488 = vshrl.u32 %v487, 7
        %v489 = vsub.s32 2, %v488
        %v490 = vrot.slane %v392, %v489
        %v491 = vadd.f32 %v486, %v490
        %v492 = vpack.c.bf16 %v491, %v491
        %v493 = vld [vmem:[%s2] sm:$0xf]
        %v494 = vld [vmem:[%s2 + $0x4] sm:$0xf]
        %v495 = vld [vmem:[%s2 + $0x8] sm:$0xf]
        %v496 = vld [vmem:[%s2 + $0xc] sm:$0xf]
        %498 = vset.pattern.permute.xlu0 0
        %499 = vperm.xlu0 %498, %v397
        %v500 = vpop.permute.xlu0 %499
        %503 = vset.pattern.permute.xlu0 0
        %504 = vperm.xlu0 %503, %v398
        %v505 = vpop.permute.xlu0 %504
        %508 = vset.pattern.permute.xlu0 0
        %509 = vperm.xlu0 %508, %v399
        %v510 = vpop.permute.xlu0 %509
        %513 = vset.pattern.permute.xlu0 0
        %514 = vperm.xlu0 %513, %v400
        %v515 = vpop.permute.xlu0 %514
        %v521 = vunpack.c.l.b16 %v493
        %v522 = vunpack.c.l.b16 %v494
        %v523 = vunpack.c.l.b16 %v495
        %v524 = vunpack.c.l.b16 %v496
        %v525 = vpack.c.b16 %v522, %v521
        %v526 = vpack.c.b16 %v524, %v523
        %vm527 = vcmask 64512
        %v529 = vsel %vm527, %v525, 0
        %v532 = vsel %vm527, %v526, 0
        %vm534 = vcmask 1043456
        %v536 = vsel %vm534, %v492, 0
        %538 = vmatprep.subr.bf16.mxu0 0
        %539 = vmatpush1.bf16.msra.mxu0 0
        %540 = vmatprep.subr.bf16.mxu0 0
        %541 = vmatpush1.bf16.msra.mxu0 0
        %542 = vmatprep.subr.bf16.mxu0 0
        %543 = vmatpush1.bf16.msra.mxu0 0
        %544 = vmatprep.subr.bf16.mxu0 0
        %545 = vmatpush1.bf16.msra.mxu0 0
        %546 = vmatprep.subr.bf16.mxu0 0
        %547 = vmatpush1.bf16.msra.mxu0 0
        %548 = vmatprep.subr.bf16.mxu0 0
        %549 = vmatpush1.bf16.msra.mxu0 0
        %550 = vmatprep.subr.bf16.mxu0 0
        %551 = vmatpush1.bf16.msra.mxu0 0
        %552 = vmatprep.subr.bf16.mxu0 0
        %553 = vmatpush1.bf16.msra.mxu0 %v536
        %554 = vmatprep.subr.bf16.mxu0 0
        %555 = vmatpush2.bf16.msra.mxu0 0
        %556 = vmatprep.subr.bf16.mxu0 0
        %557 = vmatpush2.bf16.msra.mxu0 0
        %558 = vmatprep.subr.bf16.mxu0 0
        %559 = vmatpush2.bf16.msra.mxu0 0
        %560 = vmatprep.subr.bf16.mxu0 0
        %561 = vmatpush2.bf16.msra.mxu0 0
        %562 = vmatprep.subr.bf16.mxu0 0
        %563 = vmatpush2.bf16.msra.mxu0 0
        %564 = vmatprep.subr.bf16.mxu0 0
        %565 = vmatpush2.bf16.msra.mxu0 0
        %566 = vmatprep.subr.bf16.mxu0 0
        %567 = vmatpush2.bf16.msra.mxu0 0
        %568 = vmatprep.subr.bf16.mxu0 0
        %569 = vmatpush2.bf16.msra.mxu0 0
        %570 = vmatprep.mubr.bf16.mxu0 0
        %571 = vmatmul.mubr.bf16.gmra.mxu0 %v529
        %v572 = vpop.f32.mrf.mxu0
        %v573 = vadd.f32 %v500, %v572
        %v574 = vpop.f32.mrf.mxu0
        %v575 = vpop.f32.mrf.mxu0
        %v576 = vadd.f32 %v505, %v575
        %v577 = vpop.f32.mrf.mxu0
        %578 = vmatprep.mubr.bf16.mxu0 0
        %579 = vmatmul.mubr.bf16.gmra.mxu0 %v532
        %v580 = vpop.f32.mrf.mxu0
        %v581 = vadd.f32 %v510, %v580
        %v582 = vpop.f32.mrf.mxu0
        %v583 = vpop.f32.mrf.mxu0
        %v584 = vadd.f32 %v515, %v583
        %v585 = vpop.f32.mrf.mxu0
        %586 = vdwg.mxu0
        %v587 = vmul.f32 %v573, %v573
        %v588 = vmul.f32 %v576, %v576
        %v589 = vmul.f32 %v581, %v581
        %v590 = vmul.f32 %v584, %v584
        %v591 = vmul.f32 %v573, %v587
        %v592 = vmul.f32 %v576, %v588
        %v593 = vmul.f32 %v581, %v589
        %v594 = vmul.f32 %v584, %v590
        %v595 = vmul.f32 %v591, 0.044715
        %v596 = vmul.f32 %v592, 0.044715
        %v597 = vmul.f32 %v593, 0.044715
        %v598 = vmul.f32 %v594, 0.044715
        %v599 = vadd.f32 %v573, %v595
        %v600 = vadd.f32 %v576, %v596
        %v601 = vadd.f32 %v581, %v597
        %v602 = vadd.f32 %v584, %v598
        %v603 = vmul.f32 %v599, 0.7978846
        %v604 = vmul.f32 %v600, 0.7978846
        %v605 = vmul.f32 %v601, 0.7978846
        %v606 = vmul.f32 %v602, 0.7978846
        %v607 = vtanh.pop %v603
        %v608 = vtanh.pop %v604
        %v609 = vtanh.pop %v605
        %v610 = vtanh.pop %v606
        %v611 = vadd.f32 %v607, 1.0
        %v612 = vadd.f32 %v608, 1.0
        %v613 = vadd.f32 %v609, 1.0
        %v614 = vadd.f32 %v610, 1.0
        %v615 = vmul.f32 %v611, 0.5
        %v616 = vmul.f32 %v612, 0.5
        %v617 = vmul.f32 %v613, 0.5
        %v618 = vmul.f32 %v614, 0.5
        %v619 = vmul.f32 %v573, %v615
        %v620 = vmul.f32 %v576, %v616
        %v621 = vmul.f32 %v581, %v617
        %v622 = vmul.f32 %v584, %v618
        %v623 = vpack.c.bf16 %v620, %v619
        %v624 = vpack.c.bf16 %v622, %v621
        %v625 = vld [vmem:[%s3] sm:$0xf]
        %627 = vset.pattern.permute.xlu0 0
        %628 = vperm.xlu0 %627, %v401
        %v629 = vpop.permute.xlu0 %628
        %v632 = vsel %vm424, %v625, 0
        %634 = vmatprep.subr.bf16.mxu0 0
        %635 = vmatpush1.bf16.msra.mxu0 0
        %636 = vmatprep.subr.bf16.mxu0 0
        %637 = vmatpush1.bf16.msra.mxu0 0
        %638 = vmatprep.subr.bf16.mxu0 0
        %639 = vmatpush1.bf16.msra.mxu0 0
        %640 = vmatprep.subr.bf16.mxu0 0
        %641 = vmatpush1.bf16.msra.mxu0 0
        %642 = vmatprep.subr.bf16.mxu0 0
        %643 = vmatpush1.bf16.msra.mxu0 0
        %644 = vmatprep.subr.bf16.mxu0 0
        %645 = vmatpush1.bf16.msra.mxu0 0
        %646 = vmatprep.subr.bf16.mxu0 0
        %647 = vmatpush1.bf16.msra.mxu0 %v624
        %648 = vmatprep.subr.bf16.mxu0 0
        %649 = vmatpush1.bf16.msra.mxu0 %v623
        %650 = vmatprep.subr.bf16.mxu0 0
        %651 = vmatpush2.bf16.msra.mxu0 0
        %652 = vmatprep.subr.bf16.mxu0 0
        %653 = vmatpush2.bf16.msra.mxu0 0
        %654 = vmatprep.subr.bf16.mxu0 0
        %655 = vmatpush2.bf16.msra.mxu0 0
        %656 = vmatprep.subr.bf16.mxu0 0
        %657 = vmatpush2.bf16.msra.mxu0 0
        %658 = vmatprep.subr.bf16.mxu0 0
        %659 = vmatpush2.bf16.msra.mxu0 0
        %660 = vmatprep.subr.bf16.mxu0 0
        %661 = vmatpush2.bf16.msra.mxu0 0
        %662 = vmatprep.subr.bf16.mxu0 0
        %663 = vmatpush2.bf16.msra.mxu0 0
        %664 = vmatprep.subr.bf16.mxu0 0
        %665 = vmatpush2.bf16.msra.mxu0 0
        %666 = vmatprep.mubr.bf16.mxu0 0
        %667 = vmatmul.mubr.bf16.gmra.mxu0 %v632
        %v668 = vpop.f32.mrf.mxu0
        %v669 = vadd.f32 %v629, %v668
        %v670 = vpop.f32.mrf.mxu0
        %v671 = vpop.f32.mrf.mxu0
        %v672 = vpop.f32.mrf.mxu0
        %673 = vdwg.mxu0
        %v674 = vadd.f32 %v463, %v669
        %675 = vst.msk [vmem:[#allocation2] sm:$0xff] %vm424, %v674
        %v676 = vsel %vm424, %v674, 0.0
        %677 = vadd.xlane.f32.xlu0 %v676
        %v678 = vpop.xlane.xlu0 %677
        %v679 = vmul.f32 %v678, %v471
        %v680 = vsub.f32 %v674, %v679
        %v681 = vmul.f32 %v680, %v680
        %v682 = vsel %vm424, %v681, 0.0
        %683 = vadd.xlane.f32.xlu0 %v682
        %v684 = vpop.xlane.xlu0 %683
        %v685 = vmul.f32 %v684, %v471
        %v686 = vadd.f32 %v685, 1e-05
        %v687 = vrsqrt.pop %v686
        %v688 = vmul.f32 %v680, %v687
        %v689 = vlaneseq
        %v690 = vshrl.u32 %v689, 7
        %v691 = vsub.s32 3, %v690
        %v692 = vrot.slane %v392, %v691
        %v693 = vmul.f32 %v688, %v692
        %v694 = vlaneseq
        %v695 = vshrl.u32 %v694, 7
        %v696 = vsub.s32 4, %v695
        %v697 = vrot.slane %v392, %v696
        %v698 = vadd.f32 %v693, %v697
        %v699 = vpack.c.bf16 %v698, %v698
        %vm700 = vcmask 257024
        %701 = vst.msk [vmem:[#allocation3] sm:$0xf] %vm700, %v699
        %702 = vst.msk [vmem:[#allocation4] sm:$0xff] %vm424, 0.0
      $region60: #{dwt_mixer_seq_cls.1} parent=55 // pred_fallthru
        _
      %v703 = vld [vmem:[#allocation3] sm:$0xf]
      %v704 = vld [vmem:[%s378] sm:$0xf]
      %v705 = vld [vmem:[%s378 + $0x4] sm:$0xf]
      %v706 = vld [vmem:[%s378 + $0x8] sm:$0xf]
      %v707 = vld [vmem:[%s378 + $0xc] sm:$0xf]
      %v708 = vld [vmem:[%s387] sm:$0x1]
      %v710 = vlaneseq
      %v711 = vshrl.u32 %v710, 7
      %v712 = vsub.s32 0, %v711
      %v713 = vrot.slane %v708, %v712
      %v719 = vunpack.c.l.b16 %v704
      %v720 = vunpack.c.l.b16 %v705
      %v721 = vunpack.c.l.b16 %v706
      %v722 = vunpack.c.l.b16 %v707
      %v723 = vpack.c.b16 %v720, %v719
      %v724 = vpack.c.b16 %v722, %v721
      %vm727 = vcmask 261120
      %v729 = vsel %vm727, %v703, 0
      %731 = vmatprep.subr.bf16.mxu0 0
      %732 = vmatpush1.bf16.msra.mxu0 0
      %733 = vmatprep.subr.bf16.mxu0 0
      %734 = vmatpush1.bf16.msra.mxu0 0
      %735 = vmatprep.subr.bf16.mxu0 0
      %736 = vmatpush1.bf16.msra.mxu0 0
      %737 = vmatprep.subr.bf16.mxu0 0
      %738 = vmatpush1.bf16.msra.mxu0 0
      %739 = vmatprep.subr.bf16.mxu0 0
      %740 = vmatpush1.bf16.msra.mxu0 0
      %741 = vmatprep.subr.bf16.mxu0 0
      %742 = vmatpush1.bf16.msra.mxu0 0
      %743 = vmatprep.subr.bf16.mxu0 0
      %744 = vmatpush1.bf16.msra.mxu0 %v724
      %745 = vmatprep.subr.bf16.mxu0 0
      %746 = vmatpush1.bf16.msra.mxu0 %v723
      %747 = vmatprep.subr.bf16.mxu0 0
      %748 = vmatpush2.bf16.msra.mxu0 0
      %749 = vmatprep.subr.bf16.mxu0 0
      %750 = vmatpush2.bf16.msra.mxu0 0
      %751 = vmatprep.subr.bf16.mxu0 0
      %752 = vmatpush2.bf16.msra.mxu0 0
      %753 = vmatprep.subr.bf16.mxu0 0
      %754 = vmatpush2.bf16.msra.mxu0 0
      %755 = vmatprep.subr.bf16.mxu0 0
      %756 = vmatpush2.bf16.msra.mxu0 0
      %757 = vmatprep.subr.bf16.mxu0 0
      %758 = vmatpush2.bf16.msra.mxu0 0
      %759 = vmatprep.subr.bf16.mxu0 0
      %760 = vmatpush2.bf16.msra.mxu0 0
      %761 = vmatprep.subr.bf16.mxu0 0
      %762 = vmatpush2.bf16.msra.mxu0 0
      %763 = vmatprep.mubr.bf16.mxu0 0
      %764 = vmatmul.mubr.bf16.gmra.mxu0 %v729
      %v765 = vpop.f32.mrf.mxu0
      %v766 = vadd.f32 %v713, %v765
      %v767 = vpop.f32.mrf.mxu0
      %v768 = vpop.f32.mrf.mxu0
      %v769 = vpop.f32.mrf.mxu0
      %770 = vdwg.mxu0
      %v771 = vmul.f32 %v766, %v766
      %v772 = vmul.f32 %v766, %v771
      %v773 = vmul.f32 %v772, 0.044715
      %v774 = vadd.f32 %v766, %v773
      %v775 = vmul.f32 %v774, 0.7978846
      %v776 = vtanh.pop %v775
      %v777 = vadd.f32 %v776, 1.0
      %v778 = vmul.f32 %v777, 0.5
      %v779 = vmul.f32 %v766, %v778
      %v780 = vpack.c.bf16 %v779, %v779
      %v781 = vld [vmem:[#allocation4] sm:$0xff]
      %v782 = vld [vmem:[%s383] sm:$0xf]
      %v783 = vld [vmem:[%s383 + $0x4] sm:$0xf]
      %v784 = vld [vmem:[%s383 + $0x8] sm:$0xf]
      %v785 = vld [vmem:[%s383 + $0xc] sm:$0xf]
      %v786 = vld [vmem:[%s383 + $0x10] sm:$0xf]
      %v787 = vld [vmem:[%s383 + $0x14] sm:$0xf]
      %v788 = vld [vmem:[%s383 + $0x18] sm:$0xf]
      %v789 = vld [vmem:[%s383 + $0x1c] sm:$0xf]
      %v798 = vunpack.c.l.b16 %v782
      %v799 = vunpack.c.l.b16 %v783
      %v800 = vunpack.c.l.b16 %v784
      %v801 = vunpack.c.l.b16 %v785
      %v802 = vunpack.c.l.b16 %v786
      %v803 = vunpack.c.l.b16 %v787
      %v804 = vunpack.c.l.b16 %v788
      %v805 = vunpack.c.l.b16 %v789
      %v806 = vpack.c.b16 %v799, %v798
      %v807 = vpack.c.b16 %v801, %v800
      %v808 = vpack.c.b16 %v803, %v802
      %v809 = vpack.c.b16 %v805, %v804
      %vm814 = vcmask 523264
      %v816 = vsel %vm814, %v780, 0
      %818 = vmatprep.subr.bf16.mxu0 0
      %819 = vmatpush1.bf16.msra.mxu0 0
      %820 = vmatprep.subr.bf16.mxu0 0
      %821 = vmatpush1.bf16.msra.mxu0 0
      %822 = vmatprep.subr.bf16.mxu0 0
      %823 = vmatpush1.bf16.msra.mxu0 0
      %824 = vmatprep.subr.bf16.mxu0 0
      %825 = vmatpush1.bf16.msra.mxu0 0
      %826 = vmatprep.subr.bf16.mxu0 0
      %827 = vmatpush1.bf16.msra.mxu0 %v809
      %828 = vmatprep.subr.bf16.mxu0 0
      %829 = vmatpush1.bf16.msra.mxu0 %v808
      %830 = vmatprep.subr.bf16.mxu0 0
      %831 = vmatpush1.bf16.msra.mxu0 %v807
      %832 = vmatprep.subr.bf16.mxu0 0
      %833 = vmatpush1.bf16.msra.mxu0 %v806
      %834 = vmatprep.subr.bf16.mxu0 0
      %835 = vmatpush2.bf16.msra.mxu0 0
      %836 = vmatprep.subr.bf16.mxu0 0
      %837 = vmatpush2.bf16.msra.mxu0 0
      %838 = vmatprep.subr.bf16.mxu0 0
      %839 = vmatpush2.bf16.msra.mxu0 0
      %840 = vmatprep.subr.bf16.mxu0 0
      %841 = vmatpush2.bf16.msra.mxu0 0
      %842 = vmatprep.subr.bf16.mxu0 0
      %843 = vmatpush2.bf16.msra.mxu0 0
      %844 = vmatprep.subr.bf16.mxu0 0
      %845 = vmatpush2.bf16.msra.mxu0 0
      %846 = vmatprep.subr.bf16.mxu0 0
      %847 = vmatpush2.bf16.msra.mxu0 0
      %848 = vmatprep.subr.bf16.mxu0 0
      %849 = vmatpush2.bf16.msra.mxu0 0
      %850 = vmatprep.mubr.bf16.mxu0 0
      %851 = vmatmul.mubr.bf16.gmra.mxu0 %v816
      %v852 = vpop.f32.mrf.mxu0
      %v853 = vadd.f32 0.0, %v852
      %v854 = vpop.f32.mrf.mxu0
      %v855 = vpop.f32.mrf.mxu0
      %v856 = vpop.f32.mrf.mxu0
      %857 = vdwg.mxu0
      %v858 = vadd.f32 %v781, %v853
      %859 = vst.msk [vmem:[#allocation4] sm:$0xff] %vm727, %v858
      // Predicated region
      $region61: #{dwt_mixer_seq_cls.1} parent=55 // pred_check
        %p860 = pneg %p393
      $region62: #{dwt_mixer_seq_cls.1} parent=55 // pred_check_branch
        %862 = sbr.rel (%p860) target = $region64
      $region63: #{dwt_mixer_seq_cls.1} parent=55 // pred_region
        %v863 = vld [vmem:[#allocation2] sm:$0xff]
        %v864 = vld [vmem:[#allocation4] sm:$0xff]
        %v865 = vadd.f32 %v863, %v864
        %v866 = vlaneseq
        %v867 = vshrl.u32 %v866, 7
        %v868 = vsub.s32 5, %v867
        %v869 = vrot.slane %v392, %v868
        %v870 = vadd.f32 %v865, %v869
        %v871 = vsel %vm727, %v870, 0.0
        %v872 = vrot.slane %v871, 4
        %v873 = vadd.f32 %v871, %v872
        %v874 = vrot.slane %v873, 2
        %v875 = vadd.f32 %v873, %v874
        %v876 = vrot.slane %v875, 1
        %v877 = vadd.f32 %v875, %v876
        %vm878 = vcmask 253952
        %879 = vst.msk [vmem:[%s390] sm:$0x1] %vm878, %v877
      $region64: #{dwt_mixer_seq_cls.1} parent=55 // pred_fallthru
        _
      %p880 = scmp.lt.s32.totalorder %s24, 1
      %s881 = scalar_select %p880, %s24, 1
      %s882 = scalar_lea.vmem %s9, %s881
      // Predicated region
      $region65: #{dwt_mixer_seq_cls.1} parent=55 // pred_check
        %p883 = pneg %p259
      $region66: #{dwt_mixer_seq_cls.1} parent=55 // pred_check_branch
        %885 = sbr.rel (%p883) target = $region68
      $region67: #{dwt_mixer_seq_cls.1} parent=55 // pred_region
        _
      $region68: #{dwt_mixer_seq_cls.1} parent=55 // pred_fallthru
        _
    $region56: #{dwt_mixer_seq_cls.1} parent=5 // pred_fallthru
      _
    %p886 = scmp.le.s32.totalorder 2, %s15
    // Predicated region
    $region69: #{dwt_mixer_seq_cls.1} parent=5 // pred_check
      %p887 = pneg %p886
    $region70: #{dwt_mixer_seq_cls.1} parent=5 // pred_check_branch
      %889 = sbr.rel (%p887) target = $region72
    $region71: #{dwt_mixer_seq_cls.1} parent=5 // pred_region
      %s890 = ssub.s32 %s15, 2
      // Predicated region
      $region73: #{dwt_mixer_seq_cls.1} parent=71 // pred_check
        %p891 = pneg %p265
      $region74: #{dwt_mixer_seq_cls.1} parent=71 // pred_check_branch
        %893 = sbr.rel (%p891) target = $region76
      $region75: #{dwt_mixer_seq_cls.1} parent=71 // pred_region
        %p894 = scmp.lt.s32.totalorder %s26, 1
        %s895 = scalar_select %p894, %s26, 1
        %s896 = scalar_lea.vmem %s9, %s895
      $region76: #{dwt_mixer_seq_cls.1} parent=71 // pred_fallthru
        _
    $region72: #{dwt_mixer_seq_cls.1} parent=5 // pred_fallthru
      _
  $region6: #{dwt_mixer_seq_cls.1} parent=0 // loop_footer
    %s19 = sadd.s32 1, %s15
  $region7: #{dwt_mixer_seq_cls.1} parent=0 // loop_footer_branch
    %14 = sbr.rel target = $region3
  $region8: #{dwt_mixer_seq_cls.1} parent=0 // loop_exit
    _

</llo_original>
